<compile_context>
chip_gen: v7x
topology: tpu7x:2x2x1
jax: 0.10.0
libtpu: 0.0.40
codegen_flags: <defaults>
</compile_context>

<pallas_src>
import jax
import jax.numpy as jnp
from jax import lax
from jax.experimental import pallas as pl
from jax.experimental.pallas import tpu as pltpu


def _round_up(x, m):
    return ((x + m - 1) // m) * m


def _k_tiling(in_dim):
    """K (feature-dim) tile size and zero-padded K extent.

    Full (128-aligned) K for small problems; 2048-wide tiles otherwise, with
    in_dim zero-padded up to a tile multiple (zeros contribute 0 to the dot)."""
    if in_dim <= 4096:
        tk = max(128, _round_up(in_dim, 128))
        return tk, tk
    tk = 2048
    return tk, _round_up(in_dim, tk)


def _make_kernel(w_resident, tk):
    """Build the kernel body.  `w_resident`: weight ref holds the FULL [K, N]
    weight (sliced per K step); otherwise it holds one (tk, n_pad) block."""

    def kernel(x_ref, w_ref, logits_ref, l2_ref):
        # x_ref:      (tm, tk)            f32  -- streamed rows of flattened input
        # w_ref:      (in_dim_pad, n_pad) bf16 (resident)  or  (tk, n_pad) bf16
        # logits_ref: (tm, n_pad)         f32  -- K-resident; doubles as accumulator
        # l2_ref:     (tm, n_pad)         f32  -- written only in the epilogue
        k = pl.program_id(1)

        @pl.when(k == 0)
        def _():
            logits_ref[...] = jnp.zeros_like(logits_ref)

        # In-kernel bf16 cast of x: saves a separate XLA pass (extra HBM round
        # trip) in the wrapper; accumulation stays f32 on the MXU.
        x_blk = x_ref[...].astype(jnp.bfloat16)
        if w_resident:
            start = pl.multiple_of(k * tk, 128)
            w_blk = w_ref[pl.ds(start, tk), :]
        else:
            w_blk = w_ref[...]
        logits_ref[...] += jnp.dot(x_blk, w_blk,
                                   preferred_element_type=jnp.float32)

        @pl.when(k == pl.num_programs(1) - 1)
        def _():
            logits = logits_ref[...]                                   # f32
            # Normalize(power=2): out = x / sqrt(sum(x^2, dim=1)); rsqrt*mul uses
            # the EUP slot instead of a VALU divide.  max(.,tiny) only guards the
            # zero-padded rows (torch would NaN there; they are sliced off anyway).
            ssq = jnp.sum(logits * logits, axis=1, keepdims=True)       # f32 epilogue
            inv_norm = lax.rsqrt(jnp.maximum(ssq, 1e-30))
            l2_ref[...] = (logits * inv_norm).astype(l2_ref.dtype)

    return kernel


def prepare_weight(weight):
    """One-time (model-load) weight prep.

    torch layout [out_dim, in_dim] f32  ->  [in_dim_pad, n_pad] bf16:
      * transposed ONCE so the kernel contracts the standard [K, N] layout
        (no per-forward transpose / HBM round trip),
      * out_dim zero-padded to a multiple of 128 (lane-dense kernel outputs),
      * in_dim zero-padded to the K tile quantum (zero rows contribute 0)."""
    out_dim, in_dim = weight.shape
    n_pad = max(128, _round_up(out_dim, 128))
    _, in_dim_pad = _k_tiling(in_dim)
    w = weight.astype(jnp.bfloat16).T                       # [in_dim, out_dim]
    w = jnp.pad(w, ((0, in_dim_pad - in_dim), (0, n_pad - out_dim)))
    return w


def icprotonet_forward(x, w_prepared, out_dim):
    """x: [B, C, H, W] (or any [B, ...]); w_prepared: prepare_weight(torch_weight).
    Returns (out_logits, out_l2norm), both [B, out_dim] float32."""
    B = x.shape[0]
    x2d = x.reshape(B, -1).astype(jnp.float32)    # x.view(x.size(0), -1); stays f32 --
    in_dim = x2d.shape[1]                         # the bf16 cast happens in-kernel.
    in_dim_pad, n_pad = w_prepared.shape
    tk, in_dim_pad_chk = _k_tiling(in_dim)
    assert in_dim_pad == in_dim_pad_chk, "weight was prepared for a different in_dim"
    assert n_pad >= out_dim

    # --- M (row) tiling ------------------------------------------------------
    # >=2 "parallel" M tiles for mid/large batches so v7x megacore can split the
    # grid; tiny batches padded to the 8-sublane minimum for clean vreg layout.
    b8 = max(8, _round_up(B, 8))
    if b8 <= 128:
        tm, b_pad = b8, b8
    elif b8 <= 512:
        tm, b_pad = 128, _round_up(B, 128)
    else:
        tm, b_pad = 256, _round_up(B, 256)

    if (b_pad, in_dim_pad) != (B, in_dim):
        x2d = jnp.pad(x2d, ((0, b_pad - B), (0, in_dim_pad - in_dim)))

    m_tiles, k_tiles = b_pad // tm, in_dim_pad // tk
    grid = (m_tiles, k_tiles)

    # --- weight residency ------------------------------------------------------
    # If W (double-buffered) fits comfortably, keep the whole [K, N] weight
    # VMEM-resident (constant block index -> fetched once for the entire grid)
    # instead of re-streaming it from HBM for every M tile.
    w_full_2buf = 2 * in_dim_pad * n_pad * 2                # bf16, x2 buffers
    w_resident = (m_tiles > 1) and (k_tiles > 1) and (w_full_2buf <= (24 << 20))
    if w_resident:
        w_spec = pl.BlockSpec((in_dim_pad, n_pad), lambda i, k: (0, 0))
    else:
        w_spec = pl.BlockSpec((tk, n_pad), lambda i, k: (k, 0))

    # --- explicit scoped-VMEM budget (v5e default is only 16 MiB) --------------
    x_bytes = 2 * tm * tk * 4                               # f32 x, double-buffered
    w_bytes = w_full_2buf if w_resident else 2 * tk * n_pad * 2
    out_bytes = 2 * 2 * tm * n_pad * 4                      # 2 resident f32 outputs
    vmem_limit = min(max(int((x_bytes + w_bytes + out_bytes) * 1.3) + (2 << 20),
                         16 << 20), 100 << 20)

    out_shapes = (
        jax.ShapeDtypeStruct((b_pad, n_pad), jnp.float32),
        jax.ShapeDtypeStruct((b_pad, n_pad), jnp.float32),
    )

    logits_p, l2_p = pl.pallas_call(
        _make_kernel(w_resident, tk),
        out_shape=out_shapes,
        grid_spec=pltpu.PrefetchScalarGridSpec(
            num_scalar_prefetch=0,
            grid=grid,
            in_specs=[
                pl.BlockSpec((tm, tk), lambda i, k: (i, k)),   # x rows (streamed)
                w_spec,                                        # weight [K, N] bf16
            ],
            out_specs=[
                pl.BlockSpec((tm, n_pad), lambda i, k: (i, 0)),  # resident across K;
                pl.BlockSpec((tm, n_pad), lambda i, k: (i, 0)),  # logits == accumulator
            ],
        ),
        compiler_params=pltpu.CompilerParams(
            dimension_semantics=("parallel", "arbitrary"),
            vmem_limit_bytes=vmem_limit),
    )(x2d, w_prepared)

    # Strip row/lane padding (cheap slice; consumers that tolerate padded shapes
    # could read the (b_pad, n_pad) buffers directly and skip this copy).
    return logits_p[:B, :out_dim], l2_p[:B, :out_dim]


def _reference(x, weight):
    """Pure-JAX f32 reference of the torch semantics."""
    x2d = x.reshape(x.shape[0], -1)
    logits = x2d @ weight.T
    norm = jnp.sqrt(jnp.sum(logits ** 2, axis=1, keepdims=True))
    return logits, logits / norm


if __name__ == "__main__":
    key = jax.random.PRNGKey(0)
    k_x, k_w, k_x2, k_w2 = jax.random.split(key, 4)

    # --- primary check: small shapes consistent with the module ----------------
    B, C, H, W = 2, 4, 16, 16
    in_dim = C * H * W            # 1024
    out_dim = 32

    x = jax.random.normal(k_x, (B, C, H, W), dtype=jnp.float32)
    bound = 1.0 / (in_dim ** 0.5)   # nn.Linear-like uniform init (torch layout)
    weight = jax.random.uniform(k_w, (out_dim, in_dim), dtype=jnp.float32,
                                minval=-bound, maxval=bound)

    w_prep = prepare_weight(weight)                 # one-time, model-load cost
    out_logits, out_l2norm = icprotonet_forward(x, w_prep, out_dim)
    jax.block_until_ready((out_logits, out_l2norm))

    ref_logits, ref_l2 = _reference(x, weight)
    assert out_logits.shape == (B, out_dim) and out_l2norm.shape == (B, out_dim)
    # Tolerance accounts for bf16 MXU operands with f32 accumulation.
    assert jnp.allclose(out_logits, ref_logits, atol=3e-2, rtol=3e-2)
    assert jnp.allclose(out_l2norm, ref_l2, atol=3e-2, rtol=3e-2)
    assert bool(jnp.all(jnp.isfinite(out_logits))) and bool(jnp.all(jnp.isfinite(out_l2norm)))

    # --- secondary check: exercises multi-M-tile + multi-K-tile + resident-W path
    B2, C2, H2, W2 = 192, 5, 25, 40                 # in_dim = 5000 -> padded to 6144
    in_dim2, out_dim2 = C2 * H2 * W2, 200           # out_dim padded to 256
    x2 = jax.random.normal(k_x2, (B2, C2, H2, W2), dtype=jnp.float32)
    bound2 = 1.0 / (in_dim2 ** 0.5)
    weight2 = jax.random.uniform(k_w2, (out_dim2, in_dim2), dtype=jnp.float32,
                                 minval=-bound2, maxval=bound2)
    w2_prep = prepare_weight(weight2)
    out_logits2, out_l2norm2 = icprotonet_forward(x2, w2_prep, out_dim2)
    jax.block_until_ready((out_logits2, out_l2norm2))

    ref_logits2, ref_l22 = _reference(x2, weight2)
    assert out_logits2.shape == (B2, out_dim2) and out_l2norm2.shape == (B2, out_dim2)
    assert jnp.allclose(out_logits2, ref_logits2, atol=3e-2, rtol=3e-2)
    assert jnp.allclose(out_l2norm2, ref_l22, atol=3e-2, rtol=3e-2)
    assert bool(jnp.all(jnp.isfinite(out_logits2))) and bool(jnp.all(jnp.isfinite(out_l2norm2)))

    print("KERNEL_OK")
</pallas_src>

<mosaic_0001>
module attributes {stable_mosaic.version = 11 : i64} {
  func.func @kernel(%arg0: i32, %arg1: i32, %arg2: memref<8x1024xf32, #tpu.memory_space<vmem>>, %arg3: memref<1024x128xbf16, #tpu.memory_space<vmem>>, %arg4: memref<8x128xf32, #tpu.memory_space<vmem>>, %arg5: memref<8x128xf32, #tpu.memory_space<vmem>>) attributes {dimension_semantics = [#tpu.dimension_semantics<parallel>, #tpu.dimension_semantics<arbitrary>], iteration_bounds = array<i64: 1, 1>, scalar_prefetch = 0 : i64, scratch_operands = 0 : i64, tpu.core_type = #tpu.core_type<tc>, window_params = [{transform_indices = @transform_0, window_bounds = array<i64: 8, 1024>}, {transform_indices = @transform_1, window_bounds = array<i64: 1024, 128>}, {transform_indices = @transform_2, window_bounds = array<i64: 8, 128>}, {transform_indices = @transform_3, window_bounds = array<i64: 8, 128>}]} {
    %c0_i32 = arith.constant 0 : i32
    %0 = arith.cmpi eq, %arg1, %c0_i32 : i32
    %1 = arith.extui %0 : i1 to i32
    %c0_i32_0 = arith.constant 0 : i32
    %2 = arith.cmpi ne, %1, %c0_i32_0 : i32
    scf.if %2 {
      %cst_10 = arith.constant 0.000000e+00 : f32
      %13 = vector.broadcast %cst_10 : f32 to vector<8x128xf32>
      %c0_11 = arith.constant 0 : index
      %c0_12 = arith.constant 0 : index
      %14 = vector.load %arg4[%c0_11, %c0_12] : memref<8x128xf32, #tpu.memory_space<vmem>>, vector<8x128xf32>
      tpu.vector_store %arg4[%c0_11, %c0_12], %13 {strides = array<i32>} : memref<8x128xf32, #tpu.memory_space<vmem>>, vector<8x128xf32>,
    } else {
    }
    %c0 = arith.constant 0 : index
    %c0_1 = arith.constant 0 : index
    %3 = vector.load %arg2[%c0, %c0_1] : memref<8x1024xf32, #tpu.memory_space<vmem>>, vector<8x1024xf32>
    %4 = arith.truncf %3 : vector<8x1024xf32> to vector<8x1024xbf16>
    %c0_2 = arith.constant 0 : index
    %c0_3 = arith.constant 0 : index
    %5 = vector.load %arg3[%c0_2, %c0_3] : memref<1024x128xbf16, #tpu.memory_space<vmem>>, vector<1024x128xbf16>
    %c0_4 = arith.constant 0 : index
    %c0_5 = arith.constant 0 : index
    %6 = vector.load %arg4[%c0_4, %c0_5] : memref<8x128xf32, #tpu.memory_space<vmem>>, vector<8x128xf32>
    %cst = arith.constant dense<0.000000e+00> : vector<8x128xf32>
    %7 = tpu.matmul %4, %5, %cst {dimension_numbers = #tpu.dot_dimension_numbers<[1], [0], [0], [1], [0, 0, 1, 1], [], []>} : vector<8x1024xbf16>, vector<1024x128xbf16>, vector<8x128xf32> -> vector<8x128xf32>
    %8 = arith.addf %6, %7 : vector<8x128xf32>
    %c0_6 = arith.constant 0 : index
    %c0_7 = arith.constant 0 : index
    %9 = vector.load %arg4[%c0_6, %c0_7] : memref<8x128xf32, #tpu.memory_space<vmem>>, vector<8x128xf32>
    tpu.vector_store %arg4[%c0_6, %c0_7], %8 {strides = array<i32>} : memref<8x128xf32, #tpu.memory_space<vmem>>, vector<8x128xf32>,
    %c0_i32_8 = arith.constant 0 : i32
    %10 = arith.cmpi eq, %arg1, %c0_i32_8 : i32
    %11 = arith.extui %10 : i1 to i32
    %c0_i32_9 = arith.constant 0 : i32
    %12 = arith.cmpi ne, %11, %c0_i32_9 : i32
    scf.if %12 {
      %c0_10 = arith.constant 0 : index
      %c0_11 = arith.constant 0 : index
      %13 = vector.load %arg4[%c0_10, %c0_11] : memref<8x128xf32, #tpu.memory_space<vmem>>, vector<8x128xf32>
      %14 = arith.mulf %13, %13 : vector<8x128xf32>
      %cst_12 = arith.constant dense<0.000000e+00> : vector<8xf32>
      %15 = vector.multi_reduction <add>, %14, %cst_12 [1] : vector<8x128xf32> to vector<8xf32>
      %16 = vector.shape_cast %15 : vector<8xf32> to vector<8x1xf32>
      %cst_13 = arith.constant 1.000000e-30 : f32
      %17 = vector.broadcast %cst_13 : f32 to vector<8x1xf32>
      %18 = arith.maximumf %16, %17 : vector<8x1xf32>
      %19 = math.rsqrt %18 : vector<8x1xf32>
      %20 = vector.broadcast %19 : vector<8x1xf32> to vector<8x128xf32>
      %21 = arith.mulf %13, %20 : vector<8x128xf32>
      %c0_14 = arith.constant 0 : index
      %c0_15 = arith.constant 0 : index
      %22 = vector.load %arg5[%c0_14, %c0_15] : memref<8x128xf32, #tpu.memory_space<vmem>>, vector<8x128xf32>
      tpu.vector_store %arg5[%c0_14, %c0_15], %21 {strides = array<i32>} : memref<8x128xf32, #tpu.memory_space<vmem>>, vector<8x128xf32>,
    } else {
    }
    return
  }
  func.func @transform_0(%arg0: i32, %arg1: i32) -> (i32, i32) {
    %c0_i32 = arith.constant 0 : i32
    return %arg0, %arg1 : i32, i32
  }
  func.func @transform_1(%arg0: i32, %arg1: i32) -> (i32, i32) {
    %c0_i32 = arith.constant 0 : i32
    %c0_i32_0 = arith.constant 0 : i32
    return %arg1, %c0_i32 : i32, i32
  }
  func.func @transform_2(%arg0: i32, %arg1: i32) -> (i32, i32) {
    %c0_i32 = arith.constant 0 : i32
    %c0_i32_0 = arith.constant 0 : i32
    return %arg0, %c0_i32 : i32, i32
  }
  func.func @transform_3(%arg0: i32, %arg1: i32) -> (i32, i32) {
    %c0_i32 = arith.constant 0 : i32
    %c0_i32_0 = arith.constant 0 : i32
    return %arg0, %c0_i32 : i32, i32
  }
}

</mosaic_0001>

<llo_original>
// kernel: tpu_custom_call.1
$region0: #{tpu_custom_call.1}
  #allocation0 [shape = 'u32[]', space=smem, size = 0x4, offset = 0x4, fixed_abs, tag = 'smem constant byte address 0x4 - core index']
  #allocation1 [shape = 'u32[144,128]{1,0:T(1,128)}', space=vmem, size = 0x12000, scoped, tag = 'internal scratch']
  %s0 = inlined_call_operand.hbm [shape: f32[8,1024], index: 0, kind: input, shape index: {}]
  %s1 = inlined_call_operand.hbm [shape: bf16[1024,128], index: 1, kind: input, shape index: {}]
  %s2 = inlined_call_operand.hbm [shape: f32[8,128], index: 2, kind: output, shape index: {0}]
  %s3 = inlined_call_operand.hbm [shape: f32[8,128], index: 3, kind: output, shape index: {1}]
  %4 = xla_tuple %s2, %s3
  %s5 = sld [smem:[#allocation0]]
  $region42: #{tpu_custom_call.1} parent=0
    _
  %s7 = ssub.s32 1, %s5
  %s8 = scalar_select 0, %s7, %s5
  $region1: #{tpu_custom_call.1} parent=0
    #allocation2 [shape = 'u8[32768]{0}', space=vmem, size = 0x8000, scoped, tag = 'input window, operand 0, single buffered']
    #allocation3 [shape = 's32[1]{0}', space=sflag, size = 0x4, scoped, tag = 'scoped memory for tpu_custom_call.1']
    #allocation4 [shape = 's32[1]{0}', space=sflag, size = 0x4, scoped, tag = 'scoped memory for tpu_custom_call.1']
    #allocation5 [shape = 'u8[262144]{0}', space=vmem, size = 0x40000, scoped, tag = 'input window, operand 1, single buffered']
    #allocation6 [shape = 's32[1]{0}', space=sflag, size = 0x4, scoped, tag = 'scoped memory for tpu_custom_call.1']
    #allocation7 [shape = 'u8[4096]{0}', space=vmem, size = 0x1000, scoped, tag = 'output window, operand 0, single buffered']
    #allocation8 [shape = 'u8[4096]{0}', space=vmem, size = 0x1000, scoped, tag = 'output window, operand 1, single buffered']
    #allocation9 [shape = 's32[1]{0}', space=sflag, size = 0x4, scoped, tag = 'scoped memory for tpu_custom_call.1']
    %9 = vsyncpa [#allocation3], 0
    %10 = vsyncpa [#allocation6], 0
    %11 = vsyncpa [#allocation4], 0
    %12 = vsyncpa [#allocation9], 0
    // Predicated region
    $region2: #{tpu_custom_call.1} parent=1 // pred_check
      _
    $region3: #{tpu_custom_call.1} parent=1 // pred_check_branch
      %14 = sbr.rel (0) target = $region5
    $region4: #{tpu_custom_call.1} parent=1 // pred_region
      %s16 = ssub.s32 1024, 1024
      %17 = vsyncadd [#allocation3], %s16
      %s19 = sshll.u32 [#allocation2], 4
      %s20 = int_to_ptr.vmem [resolvable:$true] %s19
      %22 = dma.hbm_to_vmem [thread:$0]  %s0, 1024, %s20, [#allocation3]
    $region5: #{tpu_custom_call.1} parent=1 // pred_fallthru
      _
    // Predicated region
    $region6: #{tpu_custom_call.1} parent=1 // pred_check
      _
    $region7: #{tpu_custom_call.1} parent=1 // pred_check_branch
      %24 = sbr.rel (0) target = $region9
    $region8: #{tpu_custom_call.1} parent=1 // pred_region
      %s26 = ssub.s32 8192, 8192
      %27 = vsyncadd [#allocation6], %s26
      %s28 = sshll.u32 [#allocation5], 4
      %s29 = int_to_ptr.vmem [resolvable:$true] %s28
      %34 = dma.hbm_to_vmem [thread:$0]  %s1, 8192, %s29, [#allocation6], 64, 64, 4
    $region9: #{tpu_custom_call.1} parent=1 // pred_fallthru
      _
    // Predicated region
    $region10: #{tpu_custom_call.1} parent=1 // pred_check
      _
    $region11: #{tpu_custom_call.1} parent=1 // pred_check_branch
      %36 = sbr.rel (0) target = $region13
    $region12: #{tpu_custom_call.1} parent=1 // pred_region
      %37 = dma.done [#allocation3], 1024
    $region13: #{tpu_custom_call.1} parent=1 // pred_fallthru
      _
    // Predicated region
    $region14: #{tpu_custom_call.1} parent=1 // pred_check
      _
    $region15: #{tpu_custom_call.1} parent=1 // pred_check_branch
      %39 = sbr.rel (0) target = $region17
    $region16: #{tpu_custom_call.1} parent=1 // pred_region
      %40 = dma.done [#allocation6], 8192
    $region17: #{tpu_custom_call.1} parent=1 // pred_fallthru
      _
    %p42 = scmp.eq.s32.totalorder 0, 0
    // Predicated region
    $region18: #{tpu_custom_call.1} parent=1 // pred_check
      %p43 = pneg %p42
    $region19: #{tpu_custom_call.1} parent=1 // pred_check_branch
      %45 = sbr.rel (%p43) target = $region21
    $region20: #{tpu_custom_call.1} parent=1 // pred_region
      %46 = vst [vmem:[#allocation7] sm:$0xff] 0.0
    $region21: #{tpu_custom_call.1} parent=1 // pred_fallthru
      _
    %v47 = vld [vmem:[#allocation2] sm:$0xff]
    %v48 = vld [vmem:[#allocation2 + $0x8] sm:$0xff]
    %v49 = vld [vmem:[#allocation2 + $0x10] sm:$0xff]
    %v50 = vld [vmem:[#allocation2 + $0x18] sm:$0xff]
    %v51 = vld [vmem:[#allocation2 + $0x20] sm:$0xff]
    %v52 = vld [vmem:[#allocation2 + $0x28] sm:$0xff]
    %v53 = vld [vmem:[#allocation2 + $0x30] sm:$0xff]
    %v54 = vld [vmem:[#allocation2 + $0x38] sm:$0xff]
    %v55 = vpack.c.bf16 %v47, %v47
    %v56 = vpack.c.bf16 %v48, %v48
    %v57 = vpack.c.bf16 %v49, %v49
    %v58 = vpack.c.bf16 %v50, %v50
    %v59 = vpack.c.bf16 %v51, %v51
    %v60 = vpack.c.bf16 %v52, %v52
    %v61 = vpack.c.bf16 %v53, %v53
    %v62 = vpack.c.bf16 %v54, %v54
    %v63 = vld [vmem:[#allocation5] sm:$0xf]
    %v64 = vld [vmem:[#allocation5 + $0x4] sm:$0xf]
    %v65 = vld [vmem:[#allocation5 + $0x8] sm:$0xf]
    %v66 = vld [vmem:[#allocation5 + $0xc] sm:$0xf]
    %v67 = vld [vmem:[#allocation5 + $0x10] sm:$0xf]
    %v68 = vld [vmem:[#allocation5 + $0x14] sm:$0xf]
    %v69 = vld [vmem:[#allocation5 + $0x18] sm:$0xf]
    %v70 = vld [vmem:[#allocation5 + $0x1c] sm:$0xf]
    %v71 = vld [vmem:[#allocation5 + $0x20] sm:$0xf]
    %v72 = vld [vmem:[#allocation5 + $0x24] sm:$0xf]
    %v73 = vld [vmem:[#allocation5 + $0x28] sm:$0xf]
    %v74 = vld [vmem:[#allocation5 + $0x2c] sm:$0xf]
    %v75 = vld [vmem:[#allocation5 + $0x30] sm:$0xf]
    %v76 = vld [vmem:[#allocation5 + $0x34] sm:$0xf]
    %v77 = vld [vmem:[#allocation5 + $0x38] sm:$0xf]
    %v78 = vld [vmem:[#allocation5 + $0x3c] sm:$0xf]
    %v79 = vld [vmem:[#allocation5 + $0x40] sm:$0xf]
    %v80 = vld [vmem:[#allocation5 + $0x44] sm:$0xf]
    %v81 = vld [vmem:[#allocation5 + $0x48] sm:$0xf]
    %v82 = vld [vmem:[#allocation5 + $0x4c] sm:$0xf]
    %v83 = vld [vmem:[#allocation5 + $0x50] sm:$0xf]
    %v84 = vld [vmem:[#allocation5 + $0x54] sm:$0xf]
    %v85 = vld [vmem:[#allocation5 + $0x58] sm:$0xf]
    %v86 = vld [vmem:[#allocation5 + $0x5c] sm:$0xf]
    %v87 = vld [vmem:[#allocation5 + $0x60] sm:$0xf]
    %v88 = vld [vmem:[#allocation5 + $0x64] sm:$0xf]
    %v89 = vld [vmem:[#allocation5 + $0x68] sm:$0xf]
    %v90 = vld [vmem:[#allocation5 + $0x6c] sm:$0xf]
    %v91 = vld [vmem:[#allocation5 + $0x70] sm:$0xf]
    %v92 = vld [vmem:[#allocation5 + $0x74] sm:$0xf]
    %v93 = vld [vmem:[#allocation5 + $0x78] sm:$0xf]
    %v94 = vld [vmem:[#allocation5 + $0x7c] sm:$0xf]
    %v95 = vld [vmem:[#allocation5 + $0x80] sm:$0xf]
    %v96 = vld [vmem:[#allocation5 + $0x84] sm:$0xf]
    %v97 = vld [vmem:[#allocation5 + $0x88] sm:$0xf]
    %v98 = vld [vmem:[#allocation5 + $0x8c] sm:$0xf]
    %v99 = vld [vmem:[#allocation5 + $0x90] sm:$0xf]
    %v100 = vld [vmem:[#allocation5 + $0x94] sm:$0xf]
    %v101 = vld [vmem:[#allocation5 + $0x98] sm:$0xf]
    %v102 = vld [vmem:[#allocation5 + $0x9c] sm:$0xf]
    %v103 = vld [vmem:[#allocation5 + $0xa0] sm:$0xf]
    %v104 = vld [vmem:[#allocation5 + $0xa4] sm:$0xf]
    %v105 = vld [vmem:[#allocation5 + $0xa8] sm:$0xf]
    %v106 = vld [vmem:[#allocation5 + $0xac] sm:$0xf]
    %v107 = vld [vmem:[#allocation5 + $0xb0] sm:$0xf]
    %v108 = vld [vmem:[#allocation5 + $0xb4] sm:$0xf]
    %v109 = vld [vmem:[#allocation5 + $0xb8] sm:$0xf]
    %v110 = vld [vmem:[#allocation5 + $0xbc] sm:$0xf]
    %v111 = vld [vmem:[#allocation5 + $0xc0] sm:$0xf]
    %v112 = vld [vmem:[#allocation5 + $0xc4] sm:$0xf]
    %v113 = vld [vmem:[#allocation5 + $0xc8] sm:$0xf]
    %v114 = vld [vmem:[#allocation5 + $0xcc] sm:$0xf]
    %v115 = vld [vmem:[#allocation5 + $0xd0] sm:$0xf]
    %v116 = vld [vmem:[#allocation5 + $0xd4] sm:$0xf]
    %v117 = vld [vmem:[#allocation5 + $0xd8] sm:$0xf]
    %v118 = vld [vmem:[#allocation5 + $0xdc] sm:$0xf]
    %v119 = vld [vmem:[#allocation5 + $0xe0] sm:$0xf]
    %v120 = vld [vmem:[#allocation5 + $0xe4] sm:$0xf]
    %v121 = vld [vmem:[#allocation5 + $0xe8] sm:$0xf]
    %v122 = vld [vmem:[#allocation5 + $0xec] sm:$0xf]
    %v123 = vld [vmem:[#allocation5 + $0xf0] sm:$0xf]
    %v124 = vld [vmem:[#allocation5 + $0xf4] sm:$0xf]
    %v125 = vld [vmem:[#allocation5 + $0xf8] sm:$0xf]
    %v126 = vld [vmem:[#allocation5 + $0xfc] sm:$0xf]
    %v127 = vld [vmem:[#allocation5 + $0x100] sm:$0xf]
    %v128 = vld [vmem:[#allocation5 + $0x104] sm:$0xf]
    %v129 = vld [vmem:[#allocation5 + $0x108] sm:$0xf]
    %v130 = vld [vmem:[#allocation5 + $0x10c] sm:$0xf]
    %v131 = vld [vmem:[#allocation5 + $0x110] sm:$0xf]
    %v132 = vld [vmem:[#allocation5 + $0x114] sm:$0xf]
    %v133 = vld [vmem:[#allocation5 + $0x118] sm:$0xf]
    %v134 = vld [vmem:[#allocation5 + $0x11c] sm:$0xf]
    %v135 = vld [vmem:[#allocation5 + $0x120] sm:$0xf]
    %v136 = vld [vmem:[#allocation5 + $0x124] sm:$0xf]
    %v137 = vld [vmem:[#allocation5 + $0x128] sm:$0xf]
    %v138 = vld [vmem:[#allocation5 + $0x12c] sm:$0xf]
    %v139 = vld [vmem:[#allocation5 + $0x130] sm:$0xf]
    %v140 = vld [vmem:[#allocation5 + $0x134] sm:$0xf]
    %v141 = vld [vmem:[#allocation5 + $0x138] sm:$0xf]
    %v142 = vld [vmem:[#allocation5 + $0x13c] sm:$0xf]
    %v143 = vld [vmem:[#allocation5 + $0x140] sm:$0xf]
    %v144 = vld [vmem:[#allocation5 + $0x144] sm:$0xf]
    %v145 = vld [vmem:[#allocation5 + $0x148] sm:$0xf]
    %v146 = vld [vmem:[#allocation5 + $0x14c] sm:$0xf]
    %v147 = vld [vmem:[#allocation5 + $0x150] sm:$0xf]
    %v148 = vld [vmem:[#allocation5 + $0x154] sm:$0xf]
    %v149 = vld [vmem:[#allocation5 + $0x158] sm:$0xf]
    %v150 = vld [vmem:[#allocation5 + $0x15c] sm:$0xf]
    %v151 = vld [vmem:[#allocation5 + $0x160] sm:$0xf]
    %v152 = vld [vmem:[#allocation5 + $0x164] sm:$0xf]
    %v153 = vld [vmem:[#allocation5 + $0x168] sm:$0xf]
    %v154 = vld [vmem:[#allocation5 + $0x16c] sm:$0xf]
    %v155 = vld [vmem:[#allocation5 + $0x170] sm:$0xf]
    %v156 = vld [vmem:[#allocation5 + $0x174] sm:$0xf]
    %v157 = vld [vmem:[#allocation5 + $0x178] sm:$0xf]
    %v158 = vld [vmem:[#allocation5 + $0x17c] sm:$0xf]
    %v159 = vld [vmem:[#allocation5 + $0x180] sm:$0xf]
    %v160 = vld [vmem:[#allocation5 + $0x184] sm:$0xf]
    %v161 = vld [vmem:[#allocation5 + $0x188] sm:$0xf]
    %v162 = vld [vmem:[#allocation5 + $0x18c] sm:$0xf]
    %v163 = vld [vmem:[#allocation5 + $0x190] sm:$0xf]
    %v164 = vld [vmem:[#allocation5 + $0x194] sm:$0xf]
    %v165 = vld [vmem:[#allocation5 + $0x198] sm:$0xf]
    %v166 = vld [vmem:[#allocation5 + $0x19c] sm:$0xf]
    %v167 = vld [vmem:[#allocation5 + $0x1a0] sm:$0xf]
    %v168 = vld [vmem:[#allocation5 + $0x1a4] sm:$0xf]
    %v169 = vld [vmem:[#allocation5 + $0x1a8] sm:$0xf]
    %v170 = vld [vmem:[#allocation5 + $0x1ac] sm:$0xf]
    %v171 = vld [vmem:[#allocation5 + $0x1b0] sm:$0xf]
    %v172 = vld [vmem:[#allocation5 + $0x1b4] sm:$0xf]
    %v173 = vld [vmem:[#allocation5 + $0x1b8] sm:$0xf]
    %v174 = vld [vmem:[#allocation5 + $0x1bc] sm:$0xf]
    %v175 = vld [vmem:[#allocation5 + $0x1c0] sm:$0xf]
    %v176 = vld [vmem:[#allocation5 + $0x1c4] sm:$0xf]
    %v177 = vld [vmem:[#allocation5 + $0x1c8] sm:$0xf]
    %v178 = vld [vmem:[#allocation5 + $0x1cc] sm:$0xf]
    %v179 = vld [vmem:[#allocation5 + $0x1d0] sm:$0xf]
    %v180 = vld [vmem:[#allocation5 + $0x1d4] sm:$0xf]
    %v181 = vld [vmem:[#allocation5 + $0x1d8] sm:$0xf]
    %v182 = vld [vmem:[#allocation5 + $0x1dc] sm:$0xf]
    %v183 = vld [vmem:[#allocation5 + $0x1e0] sm:$0xf]
    %v184 = vld [vmem:[#allocation5 + $0x1e4] sm:$0xf]
    %v185 = vld [vmem:[#allocation5 + $0x1e8] sm:$0xf]
    %v186 = vld [vmem:[#allocation5 + $0x1ec] sm:$0xf]
    %v187 = vld [vmem:[#allocation5 + $0x1f0] sm:$0xf]
    %v188 = vld [vmem:[#allocation5 + $0x1f4] sm:$0xf]
    %v189 = vld [vmem:[#allocation5 + $0x1f8] sm:$0xf]
    %v190 = vld [vmem:[#allocation5 + $0x1fc] sm:$0xf]
    %v191 = vld [vmem:[#allocation7] sm:$0xff]
    %v320 = vunpack.c.l.b16 %v63
    %v321 = vunpack.c.l.b16 %v64
    %v322 = vunpack.c.l.b16 %v65
    %v323 = vunpack.c.l.b16 %v66
    %v324 = vunpack.c.l.b16 %v67
    %v325 = vunpack.c.l.b16 %v68
    %v326 = vunpack.c.l.b16 %v69
    %v327 = vunpack.c.l.b16 %v70
    %v328 = vunpack.c.l.b16 %v71
    %v329 = vunpack.c.l.b16 %v72
    %v330 = vunpack.c.l.b16 %v73
    %v331 = vunpack.c.l.b16 %v74
    %v332 = vunpack.c.l.b16 %v75
    %v333 = vunpack.c.l.b16 %v76
    %v334 = vunpack.c.l.b16 %v77
    %v335 = vunpack.c.l.b16 %v78
    %v336 = vunpack.c.l.b16 %v79
    %v337 = vunpack.c.l.b16 %v80
    %v338 = vunpack.c.l.b16 %v81
    %v339 = vunpack.c.l.b16 %v82
    %v340 = vunpack.c.l.b16 %v83
    %v341 = vunpack.c.l.b16 %v84
    %v342 = vunpack.c.l.b16 %v85
    %v343 = vunpack.c.l.b16 %v86
    %v344 = vunpack.c.l.b16 %v87
    %v345 = vunpack.c.l.b16 %v88
    %v346 = vunpack.c.l.b16 %v89
    %v347 = vunpack.c.l.b16 %v90
    %v348 = vunpack.c.l.b16 %v91
    %v349 = vunpack.c.l.b16 %v92
    %v350 = vunpack.c.l.b16 %v93
    %v351 = vunpack.c.l.b16 %v94
    %v352 = vunpack.c.l.b16 %v95
    %v353 = vunpack.c.l.b16 %v96
    %v354 = vunpack.c.l.b16 %v97
    %v355 = vunpack.c.l.b16 %v98
    %v356 = vunpack.c.l.b16 %v99
    %v357 = vunpack.c.l.b16 %v100
    %v358 = vunpack.c.l.b16 %v101
    %v359 = vunpack.c.l.b16 %v102
    %v360 = vunpack.c.l.b16 %v103
    %v361 = vunpack.c.l.b16 %v104
    %v362 = vunpack.c.l.b16 %v105
    %v363 = vunpack.c.l.b16 %v106
    %v364 = vunpack.c.l.b16 %v107
    %v365 = vunpack.c.l.b16 %v108
    %v366 = vunpack.c.l.b16 %v109
    %v367 = vunpack.c.l.b16 %v110
    %v368 = vunpack.c.l.b16 %v111
    %v369 = vunpack.c.l.b16 %v112
    %v370 = vunpack.c.l.b16 %v113
    %v371 = vunpack.c.l.b16 %v114
    %v372 = vunpack.c.l.b16 %v115
    %v373 = vunpack.c.l.b16 %v116
    %v374 = vunpack.c.l.b16 %v117
    %v375 = vunpack.c.l.b16 %v118
    %v376 = vunpack.c.l.b16 %v119
    %v377 = vunpack.c.l.b16 %v120
    %v378 = vunpack.c.l.b16 %v121
    %v379 = vunpack.c.l.b16 %v122
    %v380 = vunpack.c.l.b16 %v123
    %v381 = vunpack.c.l.b16 %v124
    %v382 = vunpack.c.l.b16 %v125
    %v383 = vunpack.c.l.b16 %v126
    %v384 = vunpack.c.l.b16 %v127
    %v385 = vunpack.c.l.b16 %v128
    %v386 = vunpack.c.l.b16 %v129
    %v387 = vunpack.c.l.b16 %v130
    %v388 = vunpack.c.l.b16 %v131
    %v389 = vunpack.c.l.b16 %v132
    %v390 = vunpack.c.l.b16 %v133
    %v391 = vunpack.c.l.b16 %v134
    %v392 = vunpack.c.l.b16 %v135
    %v393 = vunpack.c.l.b16 %v136
    %v394 = vunpack.c.l.b16 %v137
    %v395 = vunpack.c.l.b16 %v138
    %v396 = vunpack.c.l.b16 %v139
    %v397 = vunpack.c.l.b16 %v140
    %v398 = vunpack.c.l.b16 %v141
    %v399 = vunpack.c.l.b16 %v142
    %v400 = vunpack.c.l.b16 %v143
    %v401 = vunpack.c.l.b16 %v144
    %v402 = vunpack.c.l.b16 %v145
    %v403 = vunpack.c.l.b16 %v146
    %v404 = vunpack.c.l.b16 %v147
    %v405 = vunpack.c.l.b16 %v148
    %v406 = vunpack.c.l.b16 %v149
    %v407 = vunpack.c.l.b16 %v150
    %v408 = vunpack.c.l.b16 %v151
    %v409 = vunpack.c.l.b16 %v152
    %v410 = vunpack.c.l.b16 %v153
    %v411 = vunpack.c.l.b16 %v154
    %v412 = vunpack.c.l.b16 %v155
    %v413 = vunpack.c.l.b16 %v156
    %v414 = vunpack.c.l.b16 %v157
    %v415 = vunpack.c.l.b16 %v158
    %v416 = vunpack.c.l.b16 %v159
    %v417 = vunpack.c.l.b16 %v160
    %v418 = vunpack.c.l.b16 %v161
    %v419 = vunpack.c.l.b16 %v162
    %v420 = vunpack.c.l.b16 %v163
    %v421 = vunpack.c.l.b16 %v164
    %v422 = vunpack.c.l.b16 %v165
    %v423 = vunpack.c.l.b16 %v166
    %v424 = vunpack.c.l.b16 %v167
    %v425 = vunpack.c.l.b16 %v168
    %v426 = vunpack.c.l.b16 %v169
    %v427 = vunpack.c.l.b16 %v170
    %v428 = vunpack.c.l.b16 %v171
    %v429 = vunpack.c.l.b16 %v172
    %v430 = vunpack.c.l.b16 %v173
    %v431 = vunpack.c.l.b16 %v174
    %v432 = vunpack.c.l.b16 %v175
    %v433 = vunpack.c.l.b16 %v176
    %v434 = vunpack.c.l.b16 %v177
    %v435 = vunpack.c.l.b16 %v178
    %v436 = vunpack.c.l.b16 %v179
    %v437 = vunpack.c.l.b16 %v180
    %v438 = vunpack.c.l.b16 %v181
    %v439 = vunpack.c.l.b16 %v182
    %v440 = vunpack.c.l.b16 %v183
    %v441 = vunpack.c.l.b16 %v184
    %v442 = vunpack.c.l.b16 %v185
    %v443 = vunpack.c.l.b16 %v186
    %v444 = vunpack.c.l.b16 %v187
    %v445 = vunpack.c.l.b16 %v188
    %v446 = vunpack.c.l.b16 %v189
    %v447 = vunpack.c.l.b16 %v190
    %v448 = vpack.c.b16 %v321, %v320
    %v449 = vpack.c.b16 %v323, %v322
    %v450 = vpack.c.b16 %v325, %v324
    %v451 = vpack.c.b16 %v327, %v326
    %v452 = vpack.c.b16 %v329, %v328
    %v453 = vpack.c.b16 %v331, %v330
    %v454 = vpack.c.b16 %v333, %v332
    %v455 = vpack.c.b16 %v335, %v334
    %v456 = vpack.c.b16 %v337, %v336
    %v457 = vpack.c.b16 %v339, %v338
    %v458 = vpack.c.b16 %v341, %v340
    %v459 = vpack.c.b16 %v343, %v342
    %v460 = vpack.c.b16 %v345, %v344
    %v461 = vpack.c.b16 %v347, %v346
    %v462 = vpack.c.b16 %v349, %v348
    %v463 = vpack.c.b16 %v351, %v350
    %v464 = vpack.c.b16 %v353, %v352
    %v465 = vpack.c.b16 %v355, %v354
    %v466 = vpack.c.b16 %v357, %v356
    %v467 = vpack.c.b16 %v359, %v358
    %v468 = vpack.c.b16 %v361, %v360
    %v469 = vpack.c.b16 %v363, %v362
    %v470 = vpack.c.b16 %v365, %v364
    %v471 = vpack.c.b16 %v367, %v366
    %v472 = vpack.c.b16 %v369, %v368
    %v473 = vpack.c.b16 %v371, %v370
    %v474 = vpack.c.b16 %v373, %v372
    %v475 = vpack.c.b16 %v375, %v374
    %v476 = vpack.c.b16 %v377, %v376
    %v477 = vpack.c.b16 %v379, %v378
    %v478 = vpack.c.b16 %v381, %v380
    %v479 = vpack.c.b16 %v383, %v382
    %v480 = vpack.c.b16 %v385, %v384
    %v481 = vpack.c.b16 %v387, %v386
    %v482 = vpack.c.b16 %v389, %v388
    %v483 = vpack.c.b16 %v391, %v390
    %v484 = vpack.c.b16 %v393, %v392
    %v485 = vpack.c.b16 %v395, %v394
    %v486 = vpack.c.b16 %v397, %v396
    %v487 = vpack.c.b16 %v399, %v398
    %v488 = vpack.c.b16 %v401, %v400
    %v489 = vpack.c.b16 %v403, %v402
    %v490 = vpack.c.b16 %v405, %v404
    %v491 = vpack.c.b16 %v407, %v406
    %v492 = vpack.c.b16 %v409, %v408
    %v493 = vpack.c.b16 %v411, %v410
    %v494 = vpack.c.b16 %v413, %v412
    %v495 = vpack.c.b16 %v415, %v414
    %v496 = vpack.c.b16 %v417, %v416
    %v497 = vpack.c.b16 %v419, %v418
    %v498 = vpack.c.b16 %v421, %v420
    %v499 = vpack.c.b16 %v423, %v422
    %v500 = vpack.c.b16 %v425, %v424
    %v501 = vpack.c.b16 %v427, %v426
    %v502 = vpack.c.b16 %v429, %v428
    %v503 = vpack.c.b16 %v431, %v430
    %v504 = vpack.c.b16 %v433, %v432
    %v505 = vpack.c.b16 %v435, %v434
    %v506 = vpack.c.b16 %v437, %v436
    %v507 = vpack.c.b16 %v439, %v438
    %v508 = vpack.c.b16 %v441, %v440
    %v509 = vpack.c.b16 %v443, %v442
    %v510 = vpack.c.b16 %v445, %v444
    %v511 = vpack.c.b16 %v447, %v446
    %576 = vmatprep.subr.bf16.mxu0 0
    %577 = vmatpush1.bf16.msra.mxu0 %v448
    %578 = vmatprep.subr.bf16.mxu0 0
    %579 = vmatpush1.bf16.msra.mxu0 %v449
    %580 = vmatprep.subr.bf16.mxu0 0
    %581 = vmatpush1.bf16.msra.mxu0 %v450
    %582 = vmatprep.subr.bf16.mxu0 0
    %583 = vmatpush1.bf16.msra.mxu0 %v451
    %584 = vmatprep.subr.bf16.mxu0 0
    %585 = vmatpush1.bf16.msra.mxu0 %v452
    %586 = vmatprep.subr.bf16.mxu0 0
    %587 = vmatpush1.bf16.msra.mxu0 %v453
    %588 = vmatprep.subr.bf16.mxu0 0
    %589 = vmatpush1.bf16.msra.mxu0 %v454
    %590 = vmatprep.subr.bf16.mxu0 0
    %591 = vmatpush1.bf16.msra.mxu0 %v455
    %592 = vmatprep.subr.bf16.mxu0 0
    %593 = vmatpush1.bf16.msra.mxu0 %v456
    %594 = vmatprep.subr.bf16.mxu0 0
    %595 = vmatpush1.bf16.msra.mxu0 %v457
    %596 = vmatprep.subr.bf16.mxu0 0
    %597 = vmatpush1.bf16.msra.mxu0 %v458
    %598 = vmatprep.subr.bf16.mxu0 0
    %599 = vmatpush1.bf16.msra.mxu0 %v459
    %600 = vmatprep.subr.bf16.mxu0 0
    %601 = vmatpush1.bf16.msra.mxu0 %v460
    %602 = vmatprep.subr.bf16.mxu0 0
    %603 = vmatpush1.bf16.msra.mxu0 %v461
    %604 = vmatprep.subr.bf16.mxu0 0
    %605 = vmatpush1.bf16.msra.mxu0 %v462
    %606 = vmatprep.subr.bf16.mxu0 0
    %607 = vmatpush1.bf16.msra.mxu0 %v463
    %608 = vmatprep.mubr.bf16.mxu0 %v56
    %609 = vmatmul.mubr.bf16.gmra.mrb[0].mxu0 %v55
    %v610 = vpop.f32.mrb[0].mxu0
    %v611 = vadd.f32 0.0, %v610
    %v612 = vpop.f32.mrb[0].mxu0
    %v613 = vpop.f32.mrb[0].mxu0
    %v614 = vpop.f32.mrb[0].mxu0
    %615 = vdwg.mxu0
    %616 = vmatprep.subr.bf16.mxu0 0
    %617 = vmatpush1.bf16.msra.mxu0 %v464
    %618 = vmatprep.subr.bf16.mxu0 0
    %619 = vmatpush1.bf16.msra.mxu0 %v465
    %620 = vmatprep.subr.bf16.mxu0 0
    %621 = vmatpush1.bf16.msra.mxu0 %v466
    %622 = vmatprep.subr.bf16.mxu0 0
    %623 = vmatpush1.bf16.msra.mxu0 %v467
    %624 = vmatprep.subr.bf16.mxu0 0
    %625 = vmatpush1.bf16.msra.mxu0 %v468
    %626 = vmatprep.subr.bf16.mxu0 0
    %627 = vmatpush1.bf16.msra.mxu0 %v469
    %628 = vmatprep.subr.bf16.mxu0 0
    %629 = vmatpush1.bf16.msra.mxu0 %v470
    %630 = vmatprep.subr.bf16.mxu0 0
    %631 = vmatpush1.bf16.msra.mxu0 %v471
    %632 = vmatprep.subr.bf16.mxu0 0
    %633 = vmatpush1.bf16.msra.mxu0 %v472
    %634 = vmatprep.subr.bf16.mxu0 0
    %635 = vmatpush1.bf16.msra.mxu0 %v473
    %636 = vmatprep.subr.bf16.mxu0 0
    %637 = vmatpush1.bf16.msra.mxu0 %v474
    %638 = vmatprep.subr.bf16.mxu0 0
    %639 = vmatpush1.bf16.msra.mxu0 %v475
    %640 = vmatprep.subr.bf16.mxu0 0
    %641 = vmatpush1.bf16.msra.mxu0 %v476
    %642 = vmatprep.subr.bf16.mxu0 0
    %643 = vmatpush1.bf16.msra.mxu0 %v477
    %644 = vmatprep.subr.bf16.mxu0 0
    %645 = vmatpush1.bf16.msra.mxu0 %v478
    %646 = vmatprep.subr.bf16.mxu0 0
    %647 = vmatpush1.bf16.msra.mxu0 %v479
    %648 = vmatprep.mubr.bf16.mxu0 %v58
    %649 = vmatmul.mubr.bf16.gmra.mrb[0].mxu0 %v57
    %v650 = vpop.f32.mrb[0].mxu0
    %v651 = vadd.f32 %v611, %v650
    %v652 = vpop.f32.mrb[0].mxu0
    %v653 = vpop.f32.mrb[0].mxu0
    %v654 = vpop.f32.mrb[0].mxu0
    %655 = vdwg.mxu0
    %656 = vmatprep.subr.bf16.mxu0 0
    %657 = vmatpush1.bf16.msra.mxu0 %v480
    %658 = vmatprep.subr.bf16.mxu0 0
    %659 = vmatpush1.bf16.msra.mxu0 %v481
    %660 = vmatprep.subr.bf16.mxu0 0
    %661 = vmatpush1.bf16.msra.mxu0 %v482
    %662 = vmatprep.subr.bf16.mxu0 0
    %663 = vmatpush1.bf16.msra.mxu0 %v483
    %664 = vmatprep.subr.bf16.mxu0 0
    %665 = vmatpush1.bf16.msra.mxu0 %v484
    %666 = vmatprep.subr.bf16.mxu0 0
    %667 = vmatpush1.bf16.msra.mxu0 %v485
    %668 = vmatprep.subr.bf16.mxu0 0
    %669 = vmatpush1.bf16.msra.mxu0 %v486
    %670 = vmatprep.subr.bf16.mxu0 0
    %671 = vmatpush1.bf16.msra.mxu0 %v487
    %672 = vmatprep.subr.bf16.mxu0 0
    %673 = vmatpush1.bf16.msra.mxu0 %v488
    %674 = vmatprep.subr.bf16.mxu0 0
    %675 = vmatpush1.bf16.msra.mxu0 %v489
    %676 = vmatprep.subr.bf16.mxu0 0
    %677 = vmatpush1.bf16.msra.mxu0 %v490
    %678 = vmatprep.subr.bf16.mxu0 0
    %679 = vmatpush1.bf16.msra.mxu0 %v491
    %680 = vmatprep.subr.bf16.mxu0 0
    %681 = vmatpush1.bf16.msra.mxu0 %v492
    %682 = vmatprep.subr.bf16.mxu0 0
    %683 = vmatpush1.bf16.msra.mxu0 %v493
    %684 = vmatprep.subr.bf16.mxu0 0
    %685 = vmatpush1.bf16.msra.mxu0 %v494
    %686 = vmatprep.subr.bf16.mxu0 0
    %687 = vmatpush1.bf16.msra.mxu0 %v495
    %688 = vmatprep.mubr.bf16.mxu0 %v60
    %689 = vmatmul.mubr.bf16.gmra.mrb[0].mxu0 %v59
    %v690 = vpop.f32.mrb[0].mxu0
    %v691 = vadd.f32 %v651, %v690
    %v692 = vpop.f32.mrb[0].mxu0
    %v693 = vpop.f32.mrb[0].mxu0
    %v694 = vpop.f32.mrb[0].mxu0
    %695 = vdwg.mxu0
    %696 = vmatprep.subr.bf16.mxu0 0
    %697 = vmatpush1.bf16.msra.mxu0 %v496
    %698 = vmatprep.subr.bf16.mxu0 0
    %699 = vmatpush1.bf16.msra.mxu0 %v497
    %700 = vmatprep.subr.bf16.mxu0 0
    %701 = vmatpush1.bf16.msra.mxu0 %v498
    %702 = vmatprep.subr.bf16.mxu0 0
    %703 = vmatpush1.bf16.msra.mxu0 %v499
    %704 = vmatprep.subr.bf16.mxu0 0
    %705 = vmatpush1.bf16.msra.mxu0 %v500
    %706 = vmatprep.subr.bf16.mxu0 0
    %707 = vmatpush1.bf16.msra.mxu0 %v501
    %708 = vmatprep.subr.bf16.mxu0 0
    %709 = vmatpush1.bf16.msra.mxu0 %v502
    %710 = vmatprep.subr.bf16.mxu0 0
    %711 = vmatpush1.bf16.msra.mxu0 %v503
    %712 = vmatprep.subr.bf16.mxu0 0
    %713 = vmatpush1.bf16.msra.mxu0 %v504
    %714 = vmatprep.subr.bf16.mxu0 0
    %715 = vmatpush1.bf16.msra.mxu0 %v505
    %716 = vmatprep.subr.bf16.mxu0 0
    %717 = vmatpush1.bf16.msra.mxu0 %v506
    %718 = vmatprep.subr.bf16.mxu0 0
    %719 = vmatpush1.bf16.msra.mxu0 %v507
    %720 = vmatprep.subr.bf16.mxu0 0
    %721 = vmatpush1.bf16.msra.mxu0 %v508
    %722 = vmatprep.subr.bf16.mxu0 0
    %723 = vmatpush1.bf16.msra.mxu0 %v509
    %724 = vmatprep.subr.bf16.mxu0 0
    %725 = vmatpush1.bf16.msra.mxu0 %v510
    %726 = vmatprep.subr.bf16.mxu0 0
    %727 = vmatpush1.bf16.msra.mxu0 %v511
    %728 = vmatprep.mubr.bf16.mxu0 %v62
    %729 = vmatmul.mubr.bf16.gmra.mrb[0].mxu0 %v61
    %v730 = vpop.f32.mrb[0].mxu0
    %v731 = vadd.f32 %v691, %v730
    %v732 = vpop.f32.mrb[0].mxu0
    %v733 = vpop.f32.mrb[0].mxu0
    %v734 = vpop.f32.mrb[0].mxu0
    %735 = vdwg.mxu0
    %v736 = vadd.f32 %v191, %v731
    %737 = vst [vmem:[#allocation7] sm:$0xff] %v736
    // Predicated region
    $region22: #{tpu_custom_call.1} parent=1 // pred_check
      %p738 = pneg %p42
    $region23: #{tpu_custom_call.1} parent=1 // pred_check_branch
      %740 = sbr.rel (%p738) target = $region25
    $region24: #{tpu_custom_call.1} parent=1 // pred_region
      %v741 = vld [vmem:[#allocation7] sm:$0xff]
      %v742 = vmul.f32 %v741, %v741
      %743 = vadd.xlane.f32.xlu0 %v742
      %v744 = vpop.xlane.xlu0 %743
      %v745 = vmax.f32 %v744, 1e-30
      %v746 = vrsqrt.pop %v745
      %v747 = vmul.f32 %v741, %v746
      %748 = vst [vmem:[#allocation8] sm:$0xff] %v747
    $region25: #{tpu_custom_call.1} parent=1 // pred_fallthru
      _
    // Predicated region
    $region26: #{tpu_custom_call.1} parent=1 // pred_check
      _
    $region27: #{tpu_custom_call.1} parent=1 // pred_check_branch
      %750 = sbr.rel (0) target = $region29
    $region28: #{tpu_custom_call.1} parent=1 // pred_region
      %s752 = ssub.s32 128, 128
      %753 = vsyncadd [#allocation4], %s752
      %s755 = sshll.u32 [#allocation7], 4
      %s756 = int_to_ptr.vmem [resolvable:$true] %s755
      %758 = dma.vmem_to_hbm [thread:$0]  %s756, 128, %s2, [#allocation4]
    $region29: #{tpu_custom_call.1} parent=1 // pred_fallthru
      _
    // Predicated region
    $region30: #{tpu_custom_call.1} parent=1 // pred_check
      _
    $region31: #{tpu_custom_call.1} parent=1 // pred_check_branch
      %760 = sbr.rel (0) target = $region33
    $region32: #{tpu_custom_call.1} parent=1 // pred_region
      %s762 = ssub.s32 128, 128
      %763 = vsyncadd [#allocation9], %s762
      %s765 = sshll.u32 [#allocation8], 4
      %s766 = int_to_ptr.vmem [resolvable:$true] %s765
      %768 = dma.vmem_to_hbm [thread:$0]  %s766, 128, %s3, [#allocation9]
    $region33: #{tpu_custom_call.1} parent=1 // pred_fallthru
      _
    // Predicated region
    $region34: #{tpu_custom_call.1} parent=1 // pred_check
      _
    $region35: #{tpu_custom_call.1} parent=1 // pred_check_branch
      %770 = sbr.rel (0) target = $region37
    $region36: #{tpu_custom_call.1} parent=1 // pred_region
      %771 = dma.done [#allocation4], 128
    $region37: #{tpu_custom_call.1} parent=1 // pred_fallthru
      _
    // Predicated region
    $region38: #{tpu_custom_call.1} parent=1 // pred_check
      _
    $region39: #{tpu_custom_call.1} parent=1 // pred_check_branch
      %773 = sbr.rel (0) target = $region41
    $region40: #{tpu_custom_call.1} parent=1 // pred_region
      %774 = dma.done [#allocation9], 128
    $region41: #{tpu_custom_call.1} parent=1 // pred_fallthru
      _
    %775 = vsyncpa [#allocation3], 1
    %776 = vsyncpa [#allocation6], 1
    %777 = vsyncpa [#allocation4], 1
    %778 = vsyncpa [#allocation9], 1

</llo_original>
